<compile_context>
chip_gen: v5e
topology: v5e:2x2
jax: 0.10.0
libtpu: 0.0.40
codegen_flags: <defaults>
</compile_context>

<pallas_src>
import functools

import jax
import jax.numpy as jnp
from jax.experimental import pallas as pl
from jax.experimental.pallas import tpu as pltpu

C_PAD = 128  # lane-dense feature width for all layers


def _round_up(v, m):
    return (v + m - 1) // m * m


def _fused_sage_kernel(a_ref, x_ref, *rest, num_layers):
    """Fused num_layers x (SAGEConvAttr [+ ReLU]) on whole (padded) arrays.

    a_ref : [Np, Np]  bf16 row-normalized dense adjacency (mean aggregation)
    x_ref : [Np, 128] bf16 node features (zero padded)
    rest  : num_layers groups of (w_l [128,128] bf16, b_l [1,128] f32,
            w_r [128,128] bf16), followed by the output ref [Np, 128] f32.
    """
    param_refs, o_ref = rest[:-1], rest[-1]

    a = a_ref[...]           # bf16, stays resident for all layers
    h = x_ref[...]           # bf16 activations

    for layer in range(num_layers):
        wl_ref, bl_ref, wr_ref = param_refs[3 * layer:3 * layer + 3]
        # mean aggregation of neighbor features: agg = A @ H  (bf16 in, f32 acc)
        agg = jnp.dot(a, h, preferred_element_type=jnp.float32)
        # lin_l(agg) + bias
        out = jnp.dot(agg.astype(jnp.bfloat16), wl_ref[...],
                      preferred_element_type=jnp.float32)
        out = out + bl_ref[...]
        # + lin_r(h)   (root weight, no bias)
        out = out + jnp.dot(h, wr_ref[...], preferred_element_type=jnp.float32)
        if layer < num_layers - 1:
            # ReLU; dropout is identity in inference mode
            out = jnp.maximum(out, 0.0)
            h = out.astype(jnp.bfloat16)
        else:
            o_ref[...] = out.astype(o_ref.dtype)


def _pad2d(x, rows, cols, dtype):
    out = jnp.zeros((rows, cols), dtype)
    return out.at[:x.shape[0], :x.shape[1]].set(x.astype(dtype))


def graphsage_attr_forward(x, a_norm, params, out_channels):
    """Full GraphSAGEAttr forward (inference) as one fused Pallas kernel.

    x      : [N, C_in] float32 node features
    a_norm : [N, N] float32 row-normalized dense adjacency
    params : list of (w_l [C_in, C_out], b_l [1, C_out], w_r [C_in, C_out])
    """
    n, _ = x.shape
    num_layers = len(params)
    n_pad = _round_up(max(n, C_PAD), C_PAD)

    # Pad + cast once on the host/XLA side (cheap, done outside the kernel).
    a_p = _pad2d(a_norm, n_pad, n_pad, jnp.bfloat16)
    x_p = _pad2d(x, n_pad, C_PAD, jnp.bfloat16)
    flat_params = []
    for (w_l, b_l, w_r) in params:
        flat_params.append(_pad2d(w_l, C_PAD, C_PAD, jnp.bfloat16))
        flat_params.append(_pad2d(b_l, 1, C_PAD, jnp.float32))
        flat_params.append(_pad2d(w_r, C_PAD, C_PAD, jnp.bfloat16))

    kernel = functools.partial(_fused_sage_kernel, num_layers=num_layers)
    operands = (a_p, x_p, *flat_params)

    out_pad = pl.pallas_call(
        kernel,
        out_shape=jax.ShapeDtypeStruct((n_pad, C_PAD), jnp.float32),
        grid=(1,),
        in_specs=[pl.BlockSpec(t.shape, lambda i: (0, 0)) for t in operands],
        out_specs=pl.BlockSpec((n_pad, C_PAD), lambda i: (0, 0)),
        compiler_params=pltpu.CompilerParams(
            dimension_semantics=("arbitrary",),
        ),
    )(*operands)

    return out_pad[:n, :out_channels]


def _init_linear(key, fan_in, fan_out, with_bias):
    # Deterministic init mimicking torch.nn.Linear default (uniform +/- 1/sqrt(fan_in)).
    kw, kb = jax.random.split(key)
    bound = 1.0 / jnp.sqrt(float(fan_in))
    w = jax.random.uniform(kw, (fan_in, fan_out), jnp.float32, -bound, bound)
    b = (jax.random.uniform(kb, (1, fan_out), jnp.float32, -bound, bound)
         if with_bias else jnp.zeros((1, fan_out), jnp.float32))
    return w, b


def init_graphsage_params(key, in_channels, hidden_channels, out_channels, num_layers):
    dims = ([(in_channels, hidden_channels)]
            + [(hidden_channels, hidden_channels)] * (num_layers - 2)
            + [(hidden_channels, out_channels)])
    params = []
    for (ci, co) in dims:
        key, k_l, k_r = jax.random.split(key, 3)
        w_l, b_l = _init_linear(k_l, ci, co, with_bias=True)
        w_r, _ = _init_linear(k_r, ci, co, with_bias=False)
        params.append((w_l, b_l, w_r))
    return params


def build_dense_norm_adjacency(edge_index, num_nodes):
    """edge_index: [2, E] int32, row 0 = source j, row 1 = target i.
    Returns A with A[i, j] = count(j->i) / in_degree(i)  (mean aggregation)."""
    src, dst = edge_index[0], edge_index[1]
    a = jnp.zeros((num_nodes, num_nodes), jnp.float32).at[dst, src].add(1.0)
    deg = a.sum(axis=1, keepdims=True)
    return a / jnp.maximum(deg, 1.0)


if __name__ == "__main__":
    key = jax.random.PRNGKey(0)
    k_x, k_src, k_dst, k_attr, k_params = jax.random.split(key, 5)

    N = 64            # number of graph nodes
    E = 256           # number of edges
    in_channels, hidden_channels, out_channels, num_layers = 16, 32, 8, 3

    x = jax.random.normal(k_x, (N, in_channels), jnp.float32)
    edge_index = jnp.stack([
        jax.random.randint(k_src, (E,), 0, N, dtype=jnp.int32),
        jax.random.randint(k_dst, (E,), 0, N, dtype=jnp.int32),
    ])
    edge_attr = jax.random.normal(k_attr, (E, 4), jnp.float32)  # unused by the model

    a_norm = build_dense_norm_adjacency(edge_index, N)
    params = init_graphsage_params(k_params, in_channels, hidden_channels,
                                   out_channels, num_layers)

    out = graphsage_attr_forward(x, a_norm, params, out_channels)
    out = jax.block_until_ready(out)
    assert out.shape == (N, out_channels)
    assert bool(jnp.all(jnp.isfinite(out)))
    print("KERNEL_OK")
</pallas_src>

<mosaic_0001>
module attributes {stable_mosaic.version = 11 : i64} {
  func.func @_fused_sage_kernel(%arg0: i32, %arg1: memref<128x128xbf16, #tpu.memory_space<vmem>>, %arg2: memref<128x128xbf16, #tpu.memory_space<vmem>>, %arg3: memref<128x128xbf16, #tpu.memory_space<vmem>>, %arg4: memref<1x128xf32, #tpu.memory_space<vmem>>, %arg5: memref<128x128xbf16, #tpu.memory_space<vmem>>, %arg6: memref<128x128xbf16, #tpu.memory_space<vmem>>, %arg7: memref<1x128xf32, #tpu.memory_space<vmem>>, %arg8: memref<128x128xbf16, #tpu.memory_space<vmem>>, %arg9: memref<128x128xbf16, #tpu.memory_space<vmem>>, %arg10: memref<1x128xf32, #tpu.memory_space<vmem>>, %arg11: memref<128x128xbf16, #tpu.memory_space<vmem>>, %arg12: memref<128x128xf32, #tpu.memory_space<vmem>>) attributes {dimension_semantics = [#tpu.dimension_semantics<arbitrary>], iteration_bounds = array<i64: 1>, scalar_prefetch = 0 : i64, scratch_operands = 0 : i64, tpu.core_type = #tpu.core_type<tc>, window_params = [{pipeline_mode = #tpu.pipeline_mode<synchronous>, transform_indices = @transform_0, window_bounds = array<i64: 128, 128>}, {pipeline_mode = #tpu.pipeline_mode<synchronous>, transform_indices = @transform_1, window_bounds = array<i64: 128, 128>}, {pipeline_mode = #tpu.pipeline_mode<synchronous>, transform_indices = @transform_2, window_bounds = array<i64: 128, 128>}, {pipeline_mode = #tpu.pipeline_mode<synchronous>, transform_indices = @transform_3, window_bounds = array<i64: 1, 128>}, {pipeline_mode = #tpu.pipeline_mode<synchronous>, transform_indices = @transform_4, window_bounds = array<i64: 128, 128>}, {pipeline_mode = #tpu.pipeline_mode<synchronous>, transform_indices = @transform_5, window_bounds = array<i64: 128, 128>}, {pipeline_mode = #tpu.pipeline_mode<synchronous>, transform_indices = @transform_6, window_bounds = array<i64: 1, 128>}, {pipeline_mode = #tpu.pipeline_mode<synchronous>, transform_indices = @transform_7, window_bounds = array<i64: 128, 128>}, {pipeline_mode = #tpu.pipeline_mode<synchronous>, transform_indices = @transform_8, window_bounds = array<i64: 128, 128>}, {pipeline_mode = #tpu.pipeline_mode<synchronous>, transform_indices = @transform_9, window_bounds = array<i64: 1, 128>}, {pipeline_mode = #tpu.pipeline_mode<synchronous>, transform_indices = @transform_10, window_bounds = array<i64: 128, 128>}, {pipeline_mode = #tpu.pipeline_mode<synchronous>, transform_indices = @transform_11, window_bounds = array<i64: 128, 128>}]} {
    %c0 = arith.constant 0 : index
    %c0_0 = arith.constant 0 : index
    %0 = vector.load %arg1[%c0, %c0_0] : memref<128x128xbf16, #tpu.memory_space<vmem>>, vector<128x128xbf16>
    %c0_1 = arith.constant 0 : index
    %c0_2 = arith.constant 0 : index
    %1 = vector.load %arg2[%c0_1, %c0_2] : memref<128x128xbf16, #tpu.memory_space<vmem>>, vector<128x128xbf16>
    %cst = arith.constant dense<0.000000e+00> : vector<128x128xf32>
    %2 = tpu.matmul %0, %1, %cst {dimension_numbers = #tpu.dot_dimension_numbers<[1], [0], [0], [1], [0, 0, 1, 1], [], []>} : vector<128x128xbf16>, vector<128x128xbf16>, vector<128x128xf32> -> vector<128x128xf32>
    %3 = arith.truncf %2 : vector<128x128xf32> to vector<128x128xbf16>
    %c0_3 = arith.constant 0 : index
    %c0_4 = arith.constant 0 : index
    %4 = vector.load %arg3[%c0_3, %c0_4] : memref<128x128xbf16, #tpu.memory_space<vmem>>, vector<128x128xbf16>
    %cst_5 = arith.constant dense<0.000000e+00> : vector<128x128xf32>
    %5 = tpu.matmul %3, %4, %cst_5 {dimension_numbers = #tpu.dot_dimension_numbers<[1], [0], [0], [1], [0, 0, 1, 1], [], []>} : vector<128x128xbf16>, vector<128x128xbf16>, vector<128x128xf32> -> vector<128x128xf32>
    %c0_6 = arith.constant 0 : index
    %c0_7 = arith.constant 0 : index
    %6 = vector.load %arg4[%c0_6, %c0_7] : memref<1x128xf32, #tpu.memory_space<vmem>>, vector<1x128xf32>
    %7 = vector.broadcast %6 : vector<1x128xf32> to vector<128x128xf32>
    %8 = arith.addf %5, %7 : vector<128x128xf32>
    %c0_8 = arith.constant 0 : index
    %c0_9 = arith.constant 0 : index
    %9 = vector.load %arg5[%c0_8, %c0_9] : memref<128x128xbf16, #tpu.memory_space<vmem>>, vector<128x128xbf16>
    %cst_10 = arith.constant dense<0.000000e+00> : vector<128x128xf32>
    %10 = tpu.matmul %1, %9, %cst_10 {dimension_numbers = #tpu.dot_dimension_numbers<[1], [0], [0], [1], [0, 0, 1, 1], [], []>} : vector<128x128xbf16>, vector<128x128xbf16>, vector<128x128xf32> -> vector<128x128xf32>
    %11 = arith.addf %8, %10 : vector<128x128xf32>
    %cst_11 = arith.constant 0.000000e+00 : f32
    %12 = vector.broadcast %cst_11 : f32 to vector<128x128xf32>
    %13 = arith.maximumf %11, %12 : vector<128x128xf32>
    %14 = arith.truncf %13 : vector<128x128xf32> to vector<128x128xbf16>
    %cst_12 = arith.constant dense<0.000000e+00> : vector<128x128xf32>
    %15 = tpu.matmul %0, %14, %cst_12 {dimension_numbers = #tpu.dot_dimension_numbers<[1], [0], [0], [1], [0, 0, 1, 1], [], []>} : vector<128x128xbf16>, vector<128x128xbf16>, vector<128x128xf32> -> vector<128x128xf32>
    %16 = arith.truncf %15 : vector<128x128xf32> to vector<128x128xbf16>
    %c0_13 = arith.constant 0 : index
    %c0_14 = arith.constant 0 : index
    %17 = vector.load %arg6[%c0_13, %c0_14] : memref<128x128xbf16, #tpu.memory_space<vmem>>, vector<128x128xbf16>
    %cst_15 = arith.constant dense<0.000000e+00> : vector<128x128xf32>
    %18 = tpu.matmul %16, %17, %cst_15 {dimension_numbers = #tpu.dot_dimension_numbers<[1], [0], [0], [1], [0, 0, 1, 1], [], []>} : vector<128x128xbf16>, vector<128x128xbf16>, vector<128x128xf32> -> vector<128x128xf32>
    %c0_16 = arith.constant 0 : index
    %c0_17 = arith.constant 0 : index
    %19 = vector.load %arg7[%c0_16, %c0_17] : memref<1x128xf32, #tpu.memory_space<vmem>>, vector<1x128xf32>
    %20 = vector.broadcast %19 : vector<1x128xf32> to vector<128x128xf32>
    %21 = arith.addf %18, %20 : vector<128x128xf32>
    %c0_18 = arith.constant 0 : index
    %c0_19 = arith.constant 0 : index
    %22 = vector.load %arg8[%c0_18, %c0_19] : memref<128x128xbf16, #tpu.memory_space<vmem>>, vector<128x128xbf16>
    %cst_20 = arith.constant dense<0.000000e+00> : vector<128x128xf32>
    %23 = tpu.matmul %14, %22, %cst_20 {dimension_numbers = #tpu.dot_dimension_numbers<[1], [0], [0], [1], [0, 0, 1, 1], [], []>} : vector<128x128xbf16>, vector<128x128xbf16>, vector<128x128xf32> -> vector<128x128xf32>
    %24 = arith.addf %21, %23 : vector<128x128xf32>
    %cst_21 = arith.constant 0.000000e+00 : f32
    %25 = vector.broadcast %cst_21 : f32 to vector<128x128xf32>
    %26 = arith.maximumf %24, %25 : vector<128x128xf32>
    %27 = arith.truncf %26 : vector<128x128xf32> to vector<128x128xbf16>
    %cst_22 = arith.constant dense<0.000000e+00> : vector<128x128xf32>
    %28 = tpu.matmul %0, %27, %cst_22 {dimension_numbers = #tpu.dot_dimension_numbers<[1], [0], [0], [1], [0, 0, 1, 1], [], []>} : vector<128x128xbf16>, vector<128x128xbf16>, vector<128x128xf32> -> vector<128x128xf32>
    %29 = arith.truncf %28 : vector<128x128xf32> to vector<128x128xbf16>
    %c0_23 = arith.constant 0 : index
    %c0_24 = arith.constant 0 : index
    %30 = vector.load %arg9[%c0_23, %c0_24] : memref<128x128xbf16, #tpu.memory_space<vmem>>, vector<128x128xbf16>
    %cst_25 = arith.constant dense<0.000000e+00> : vector<128x128xf32>
    %31 = tpu.matmul %29, %30, %cst_25 {dimension_numbers = #tpu.dot_dimension_numbers<[1], [0], [0], [1], [0, 0, 1, 1], [], []>} : vector<128x128xbf16>, vector<128x128xbf16>, vector<128x128xf32> -> vector<128x128xf32>
    %c0_26 = arith.constant 0 : index
    %c0_27 = arith.constant 0 : index
    %32 = vector.load %arg10[%c0_26, %c0_27] : memref<1x128xf32, #tpu.memory_space<vmem>>, vector<1x128xf32>
    %33 = vector.broadcast %32 : vector<1x128xf32> to vector<128x128xf32>
    %34 = arith.addf %31, %33 : vector<128x128xf32>
    %c0_28 = arith.constant 0 : index
    %c0_29 = arith.constant 0 : index
    %35 = vector.load %arg11[%c0_28, %c0_29] : memref<128x128xbf16, #tpu.memory_space<vmem>>, vector<128x128xbf16>
    %cst_30 = arith.constant dense<0.000000e+00> : vector<128x128xf32>
    %36 = tpu.matmul %27, %35, %cst_30 {dimension_numbers = #tpu.dot_dimension_numbers<[1], [0], [0], [1], [0, 0, 1, 1], [], []>} : vector<128x128xbf16>, vector<128x128xbf16>, vector<128x128xf32> -> vector<128x128xf32>
    %37 = arith.addf %34, %36 : vector<128x128xf32>
    %c0_31 = arith.constant 0 : index
    %c0_32 = arith.constant 0 : index
    %38 = vector.load %arg12[%c0_31, %c0_32] : memref<128x128xf32, #tpu.memory_space<vmem>>, vector<128x128xf32>
    tpu.vector_store %arg12[%c0_31, %c0_32], %37 {strides = array<i32>} : memref<128x128xf32, #tpu.memory_space<vmem>>, vector<128x128xf32>,
    return
  }
  func.func @transform_0(%arg0: i32) -> (i32, i32) {
    %c0_i32 = arith.constant 0 : i32
    %c0_i32_0 = arith.constant 0 : i32
    %c0_i32_1 = arith.constant 0 : i32
    return %c0_i32, %c0_i32_0 : i32, i32
  }
  func.func @transform_1(%arg0: i32) -> (i32, i32) {
    %c0_i32 = arith.constant 0 : i32
    %c0_i32_0 = arith.constant 0 : i32
    %c0_i32_1 = arith.constant 0 : i32
    return %c0_i32, %c0_i32_0 : i32, i32
  }
  func.func @transform_2(%arg0: i32) -> (i32, i32) {
    %c0_i32 = arith.constant 0 : i32
    %c0_i32_0 = arith.constant 0 : i32
    %c0_i32_1 = arith.constant 0 : i32
    return %c0_i32, %c0_i32_0 : i32, i32
  }
  func.func @transform_3(%arg0: i32) -> (i32, i32) {
    %c0_i32 = arith.constant 0 : i32
    %c0_i32_0 = arith.constant 0 : i32
    %c0_i32_1 = arith.constant 0 : i32
    return %c0_i32, %c0_i32_0 : i32, i32
  }
  func.func @transform_4(%arg0: i32) -> (i32, i32) {
    %c0_i32 = arith.constant 0 : i32
    %c0_i32_0 = arith.constant 0 : i32
    %c0_i32_1 = arith.constant 0 : i32
    return %c0_i32, %c0_i32_0 : i32, i32
  }
  func.func @transform_5(%arg0: i32) -> (i32, i32) {
    %c0_i32 = arith.constant 0 : i32
    %c0_i32_0 = arith.constant 0 : i32
    %c0_i32_1 = arith.constant 0 : i32
    return %c0_i32, %c0_i32_0 : i32, i32
  }
  func.func @transform_6(%arg0: i32) -> (i32, i32) {
    %c0_i32 = arith.constant 0 : i32
    %c0_i32_0 = arith.constant 0 : i32
    %c0_i32_1 = arith.constant 0 : i32
    return %c0_i32, %c0_i32_0 : i32, i32
  }
  func.func @transform_7(%arg0: i32) -> (i32, i32) {
    %c0_i32 = arith.constant 0 : i32
    %c0_i32_0 = arith.constant 0 : i32
    %c0_i32_1 = arith.constant 0 : i32
    return %c0_i32, %c0_i32_0 : i32, i32
  }
  func.func @transform_8(%arg0: i32) -> (i32, i32) {
    %c0_i32 = arith.constant 0 : i32
    %c0_i32_0 = arith.constant 0 : i32
    %c0_i32_1 = arith.constant 0 : i32
    return %c0_i32, %c0_i32_0 : i32, i32
  }
  func.func @transform_9(%arg0: i32) -> (i32, i32) {
    %c0_i32 = arith.constant 0 : i32
    %c0_i32_0 = arith.constant 0 : i32
    %c0_i32_1 = arith.constant 0 : i32
    return %c0_i32, %c0_i32_0 : i32, i32
  }
  func.func @transform_10(%arg0: i32) -> (i32, i32) {
    %c0_i32 = arith.constant 0 : i32
    %c0_i32_0 = arith.constant 0 : i32
    %c0_i32_1 = arith.constant 0 : i32
    return %c0_i32, %c0_i32_0 : i32, i32
  }
  func.func @transform_11(%arg0: i32) -> (i32, i32) {
    %c0_i32 = arith.constant 0 : i32
    %c0_i32_0 = arith.constant 0 : i32
    %c0_i32_1 = arith.constant 0 : i32
    return %c0_i32, %c0_i32_0 : i32, i32
  }
}

</mosaic_0001>

<llo_original>
// kernel: tpu_custom_call.1
$region0: #{tpu_custom_call.1}
  #allocation0 [shape = 'u32[]', space=smem, size = 0x4, offset = 0x4, fixed_abs, tag = 'smem constant byte address 0x4 - core index']
  #allocation1 [shape = 'u32[72,128]{1,0:T(1,128)}', space=vmem, size = 0x9000, scoped, tag = 'internal scratch']
  %s0 = inlined_call_operand.hbm [shape: bf16[128,128], index: 0, kind: input, shape index: {}]
  %s1 = inlined_call_operand.hbm [shape: bf16[128,128], index: 1, kind: input, shape index: {}]
  %s2 = inlined_call_operand.hbm [shape: bf16[128,128], index: 2, kind: input, shape index: {}]
  %s3 = inlined_call_operand.vmem [shape: f32[1,128], index: 3, kind: input, shape index: {}]
  %s4 = inlined_call_operand.hbm [shape: bf16[128,128], index: 4, kind: input, shape index: {}]
  %s5 = inlined_call_operand.hbm [shape: bf16[128,128], index: 5, kind: input, shape index: {}]
  %s6 = inlined_call_operand.vmem [shape: f32[1,128], index: 6, kind: input, shape index: {}]
  %s7 = inlined_call_operand.hbm [shape: bf16[128,128], index: 7, kind: input, shape index: {}]
  %s8 = inlined_call_operand.hbm [shape: bf16[128,128], index: 8, kind: input, shape index: {}]
  %s9 = inlined_call_operand.vmem [shape: f32[1,128], index: 9, kind: input, shape index: {}]
  %s10 = inlined_call_operand.hbm [shape: bf16[128,128], index: 10, kind: input, shape index: {}]
  %s11 = inlined_call_operand.hbm [shape: f32[128,128], index: 11, kind: output, shape index: {}]
  %s12 = sld [smem:[#allocation0]]
  $region86: #{tpu_custom_call.1} parent=0
    _
  %s14 = ssub.s32 1, %s12
  %s15 = scalar_select 0, %s14, %s12
  $region1: #{tpu_custom_call.1} parent=0
    #allocation2 [shape = 'u8[32768]{0}', space=vmem, size = 0x8000, scoped, tag = 'input window, operand 0, single buffered']
    #allocation3 [shape = 's32[1]{0}', space=sflag, size = 0x4, scoped, tag = 'scoped memory for tpu_custom_call.1']
    #allocation4 [shape = 's32[1]{0}', space=sflag, size = 0x4, scoped, tag = 'scoped memory for tpu_custom_call.1']
    #allocation5 [shape = 'u8[32768]{0}', space=vmem, size = 0x8000, scoped, tag = 'input window, operand 1, single buffered']
    #allocation6 [shape = 's32[1]{0}', space=sflag, size = 0x4, scoped, tag = 'scoped memory for tpu_custom_call.1']
    #allocation7 [shape = 'u8[32768]{0}', space=vmem, size = 0x8000, scoped, tag = 'input window, operand 2, single buffered']
    #allocation8 [shape = 'u8[32768]{0}', space=vmem, size = 0x8000, scoped, tag = 'input window, operand 4, single buffered']
    #allocation9 [shape = 's32[1]{0}', space=sflag, size = 0x4, scoped, tag = 'scoped memory for tpu_custom_call.1']
    #allocation10 [shape = 'u8[32768]{0}', space=vmem, size = 0x8000, scoped, tag = 'input window, operand 5, single buffered']
    #allocation11 [shape = 'u8[32768]{0}', space=vmem, size = 0x8000, scoped, tag = 'input window, operand 7, single buffered']
    #allocation12 [shape = 's32[1]{0}', space=sflag, size = 0x4, scoped, tag = 'scoped memory for tpu_custom_call.1']
    #allocation13 [shape = 'u8[32768]{0}', space=vmem, size = 0x8000, scoped, tag = 'input window, operand 8, single buffered']
    #allocation14 [shape = 'u8[32768]{0}', space=vmem, size = 0x8000, scoped, tag = 'input window, operand 10, single buffered']
    #allocation15 [shape = 's32[1]{0}', space=sflag, size = 0x4, scoped, tag = 'scoped memory for tpu_custom_call.1']
    #allocation16 [shape = 'u8[65536]{0}', space=vmem, size = 0x10000, scoped, tag = 'output window, operand 0, single buffered']
    %16 = vsyncpa [#allocation3], 0
    %17 = vsyncpa [#allocation6], 0
    %18 = vsyncpa [#allocation9], 0
    %19 = vsyncpa [#allocation12], 0
    %20 = vsyncpa [#allocation15], 0
    %21 = vsyncpa [#allocation4], 0
    // Predicated region
    $region2: #{tpu_custom_call.1} parent=1 // pred_check
      _
    $region3: #{tpu_custom_call.1} parent=1 // pred_check_branch
      %23 = sbr.rel (0) target = $region5
    $region4: #{tpu_custom_call.1} parent=1 // pred_region
      %25 = vsyncadd [#allocation3], 0
      %s26 = sshll.u32 %s0, 4
      %s27 = int_to_ptr.hbm [resolvable:$true] %s26
      %s28 = sshll.u32 [#allocation2], 4
      %s29 = int_to_ptr.vmem [resolvable:$true] %s28
      %34 = dma.hbm_to_vmem [thread:$0]  %s27, 1024, %s29, [#allocation3], 64, 64, 4
    $region5: #{tpu_custom_call.1} parent=1 // pred_fallthru
      _
    // Predicated region
    $region6: #{tpu_custom_call.1} parent=1 // pred_check
      _
    $region7: #{tpu_custom_call.1} parent=1 // pred_check_branch
      %36 = sbr.rel (0) target = $region9
    $region8: #{tpu_custom_call.1} parent=1 // pred_region
      %38 = vsyncadd [#allocation6], 0
      %s39 = sshll.u32 %s1, 4
      %s40 = int_to_ptr.hbm [resolvable:$true] %s39
      %s41 = sshll.u32 [#allocation5], 4
      %s42 = int_to_ptr.vmem [resolvable:$true] %s41
      %47 = dma.hbm_to_vmem [thread:$0]  %s40, 1024, %s42, [#allocation6], 64, 64, 4
    $region9: #{tpu_custom_call.1} parent=1 // pred_fallthru
      _
    // Predicated region
    $region10: #{tpu_custom_call.1} parent=1 // pred_check
      _
    $region11: #{tpu_custom_call.1} parent=1 // pred_check_branch
      %49 = sbr.rel (0) target = $region13
    $region12: #{tpu_custom_call.1} parent=1 // pred_region
      %51 = vsyncadd [#allocation6], 0
      %s52 = sshll.u32 %s2, 4
      %s53 = int_to_ptr.hbm [resolvable:$true] %s52
      %s54 = sshll.u32 [#allocation7], 4
      %s55 = int_to_ptr.vmem [resolvable:$true] %s54
      %60 = dma.hbm_to_vmem [thread:$0]  %s53, 1024, %s55, [#allocation6], 64, 64, 4
    $region13: #{tpu_custom_call.1} parent=1 // pred_fallthru
      _
    // Predicated region
    $region14: #{tpu_custom_call.1} parent=1 // pred_check
      _
    $region15: #{tpu_custom_call.1} parent=1 // pred_check_branch
      %62 = sbr.rel (0) target = $region17
    $region16: #{tpu_custom_call.1} parent=1 // pred_region
      _
    $region17: #{tpu_custom_call.1} parent=1 // pred_fallthru
      _
    // Predicated region
    $region18: #{tpu_custom_call.1} parent=1 // pred_check
      _
    $region19: #{tpu_custom_call.1} parent=1 // pred_check_branch
      %64 = sbr.rel (0) target = $region21
    $region20: #{tpu_custom_call.1} parent=1 // pred_region
      %66 = vsyncadd [#allocation9], 0
      %s67 = sshll.u32 %s4, 4
      %s68 = int_to_ptr.hbm [resolvable:$true] %s67
      %s69 = sshll.u32 [#allocation8], 4
      %s70 = int_to_ptr.vmem [resolvable:$true] %s69
      %75 = dma.hbm_to_vmem [thread:$0]  %s68, 1024, %s70, [#allocation9], 64, 64, 4
    $region21: #{tpu_custom_call.1} parent=1 // pred_fallthru
      _
    // Predicated region
    $region22: #{tpu_custom_call.1} parent=1 // pred_check
      _
    $region23: #{tpu_custom_call.1} parent=1 // pred_check_branch
      %77 = sbr.rel (0) target = $region25
    $region24: #{tpu_custom_call.1} parent=1 // pred_region
      %79 = vsyncadd [#allocation9], 0
      %s80 = sshll.u32 %s5, 4
      %s81 = int_to_ptr.hbm [resolvable:$true] %s80
      %s82 = sshll.u32 [#allocation10], 4
      %s83 = int_to_ptr.vmem [resolvable:$true] %s82
      %88 = dma.hbm_to_vmem [thread:$0]  %s81, 1024, %s83, [#allocation9], 64, 64, 4
    $region25: #{tpu_custom_call.1} parent=1 // pred_fallthru
      _
    // Predicated region
    $region26: #{tpu_custom_call.1} parent=1 // pred_check
      _
    $region27: #{tpu_custom_call.1} parent=1 // pred_check_branch
      %90 = sbr.rel (0) target = $region29
    $region28: #{tpu_custom_call.1} parent=1 // pred_region
      _
    $region29: #{tpu_custom_call.1} parent=1 // pred_fallthru
      _
    // Predicated region
    $region30: #{tpu_custom_call.1} parent=1 // pred_check
      _
    $region31: #{tpu_custom_call.1} parent=1 // pred_check_branch
      %92 = sbr.rel (0) target = $region33
    $region32: #{tpu_custom_call.1} parent=1 // pred_region
      %94 = vsyncadd [#allocation12], 0
      %s95 = sshll.u32 %s7, 4
      %s96 = int_to_ptr.hbm [resolvable:$true] %s95
      %s97 = sshll.u32 [#allocation11], 4
      %s98 = int_to_ptr.vmem [resolvable:$true] %s97
      %103 = dma.hbm_to_vmem [thread:$0]  %s96, 1024, %s98, [#allocation12], 64, 64, 4
    $region33: #{tpu_custom_call.1} parent=1 // pred_fallthru
      _
    // Predicated region
    $region34: #{tpu_custom_call.1} parent=1 // pred_check
      _
    $region35: #{tpu_custom_call.1} parent=1 // pred_check_branch
      %105 = sbr.rel (0) target = $region37
    $region36: #{tpu_custom_call.1} parent=1 // pred_region
      %107 = vsyncadd [#allocation12], 0
      %s108 = sshll.u32 %s8, 4
      %s109 = int_to_ptr.hbm [resolvable:$true] %s108
      %s110 = sshll.u32 [#allocation13], 4
      %s111 = int_to_ptr.vmem [resolvable:$true] %s110
      %116 = dma.hbm_to_vmem [thread:$0]  %s109, 1024, %s111, [#allocation12], 64, 64, 4
    $region37: #{tpu_custom_call.1} parent=1 // pred_fallthru
      _
    // Predicated region
    $region38: #{tpu_custom_call.1} parent=1 // pred_check
      _
    $region39: #{tpu_custom_call.1} parent=1 // pred_check_branch
      %118 = sbr.rel (0) target = $region41
    $region40: #{tpu_custom_call.1} parent=1 // pred_region
      _
    $region41: #{tpu_custom_call.1} parent=1 // pred_fallthru
      _
    // Predicated region
    $region42: #{tpu_custom_call.1} parent=1 // pred_check
      _
    $region43: #{tpu_custom_call.1} parent=1 // pred_check_branch
      %120 = sbr.rel (0) target = $region45
    $region44: #{tpu_custom_call.1} parent=1 // pred_region
      %122 = vsyncadd [#allocation15], 0
      %s123 = sshll.u32 %s10, 4
      %s124 = int_to_ptr.hbm [resolvable:$true] %s123
      %s125 = sshll.u32 [#allocation14], 4
      %s126 = int_to_ptr.vmem [resolvable:$true] %s125
      %131 = dma.hbm_to_vmem [thread:$0]  %s124, 1024, %s126, [#allocation15], 64, 64, 4
    $region45: #{tpu_custom_call.1} parent=1 // pred_fallthru
      _
    // Predicated region
    $region46: #{tpu_custom_call.1} parent=1 // pred_check
      _
    $region47: #{tpu_custom_call.1} parent=1 // pred_check_branch
      %133 = sbr.rel (0) target = $region49
    $region48: #{tpu_custom_call.1} parent=1 // pred_region
      %135 = dma.done [#allocation3], 1024
    $region49: #{tpu_custom_call.1} parent=1 // pred_fallthru
      _
    // Predicated region
    $region50: #{tpu_custom_call.1} parent=1 // pred_check
      _
    $region51: #{tpu_custom_call.1} parent=1 // pred_check_branch
      %137 = sbr.rel (0) target = $region53
    $region52: #{tpu_custom_call.1} parent=1 // pred_region
      %139 = dma.done [#allocation6], 1024
    $region53: #{tpu_custom_call.1} parent=1 // pred_fallthru
      _
    // Predicated region
    $region54: #{tpu_custom_call.1} parent=1 // pred_check
      _
    $region55: #{tpu_custom_call.1} parent=1 // pred_check_branch
      %141 = sbr.rel (0) target = $region57
    $region56: #{tpu_custom_call.1} parent=1 // pred_region
      %143 = dma.done [#allocation6], 1024
    $region57: #{tpu_custom_call.1} parent=1 // pred_fallthru
      _
    // Predicated region
    $region58: #{tpu_custom_call.1} parent=1 // pred_check
      _
    $region59: #{tpu_custom_call.1} parent=1 // pred_check_branch
      %145 = sbr.rel (0) target = $region61
    $region60: #{tpu_custom_call.1} parent=1 // pred_region
      %147 = dma.done [#allocation9], 1024
    $region61: #{tpu_custom_call.1} parent=1 // pred_fallthru
      _
    // Predicated region
    $region62: #{tpu_custom_call.1} parent=1 // pred_check
      _
    $region63: #{tpu_custom_call.1} parent=1 // pred_check_branch
      %149 = sbr.rel (0) target = $region65
    $region64: #{tpu_custom_call.1} parent=1 // pred_region
      %151 = dma.done [#allocation9], 1024
    $region65: #{tpu_custom_call.1} parent=1 // pred_fallthru
      _
    // Predicated region
    $region66: #{tpu_custom_call.1} parent=1 // pred_check
      _
    $region67: #{tpu_custom_call.1} parent=1 // pred_check_branch
      %153 = sbr.rel (0) target = $region69
    $region68: #{tpu_custom_call.1} parent=1 // pred_region
      %155 = dma.done [#allocation12], 1024
    $region69: #{tpu_custom_call.1} parent=1 // pred_fallthru
      _
    // Predicated region
    $region70: #{tpu_custom_call.1} parent=1 // pred_check
      _
    $region71: #{tpu_custom_call.1} parent=1 // pred_check_branch
      %157 = sbr.rel (0) target = $region73
    $region72: #{tpu_custom_call.1} parent=1 // pred_region
      %159 = dma.done [#allocation12], 1024
    $region73: #{tpu_custom_call.1} parent=1 // pred_fallthru
      _
    // Predicated region
    $region74: #{tpu_custom_call.1} parent=1 // pred_check
      _
    $region75: #{tpu_custom_call.1} parent=1 // pred_check_branch
      %161 = sbr.rel (0) target = $region77
    $region76: #{tpu_custom_call.1} parent=1 // pred_region
      %163 = dma.done [#allocation15], 1024
    $region77: #{tpu_custom_call.1} parent=1 // pred_fallthru
      _
    %v164 = vld [vmem:[#allocation2] sm:$0xf]
    %v165 = vld [vmem:[#allocation2 + $0x4] sm:$0xf]
    %v166 = vld [vmem:[#allocation2 + $0x8] sm:$0xf]
    %v167 = vld [vmem:[#allocation2 + $0xc] sm:$0xf]
    %v168 = vld [vmem:[#allocation2 + $0x10] sm:$0xf]
    %v169 = vld [vmem:[#allocation2 + $0x14] sm:$0xf]
    %v170 = vld [vmem:[#allocation2 + $0x18] sm:$0xf]
    %v171 = vld [vmem:[#allocation2 + $0x1c] sm:$0xf]
    %v172 = vld [vmem:[#allocation2 + $0x20] sm:$0xf]
    %v173 = vld [vmem:[#allocation2 + $0x24] sm:$0xf]
    %v174 = vld [vmem:[#allocation2 + $0x28] sm:$0xf]
    %v175 = vld [vmem:[#allocation2 + $0x2c] sm:$0xf]
    %v176 = vld [vmem:[#allocation2 + $0x30] sm:$0xf]
    %v177 = vld [vmem:[#allocation2 + $0x34] sm:$0xf]
    %v178 = vld [vmem:[#allocation2 + $0x38] sm:$0xf]
    %v179 = vld [vmem:[#allocation2 + $0x3c] sm:$0xf]
    %v180 = vld [vmem:[#allocation5] sm:$0xf]
    %v181 = vld [vmem:[#allocation5 + $0x4] sm:$0xf]
    %v182 = vld [vmem:[#allocation5 + $0x8] sm:$0xf]
    %v183 = vld [vmem:[#allocation5 + $0xc] sm:$0xf]
    %v184 = vld [vmem:[#allocation5 + $0x10] sm:$0xf]
    %v185 = vld [vmem:[#allocation5 + $0x14] sm:$0xf]
    %v186 = vld [vmem:[#allocation5 + $0x18] sm:$0xf]
    %v187 = vld [vmem:[#allocation5 + $0x1c] sm:$0xf]
    %v188 = vld [vmem:[#allocation5 + $0x20] sm:$0xf]
    %v189 = vld [vmem:[#allocation5 + $0x24] sm:$0xf]
    %v190 = vld [vmem:[#allocation5 + $0x28] sm:$0xf]
    %v191 = vld [vmem:[#allocation5 + $0x2c] sm:$0xf]
    %v192 = vld [vmem:[#allocation5 + $0x30] sm:$0xf]
    %v193 = vld [vmem:[#allocation5 + $0x34] sm:$0xf]
    %v194 = vld [vmem:[#allocation5 + $0x38] sm:$0xf]
    %v195 = vld [vmem:[#allocation5 + $0x3c] sm:$0xf]
    %v212 = vunpack.c.l.b16 %v164
    %v213 = vunpack.c.l.b16 %v165
    %v214 = vunpack.c.l.b16 %v166
    %v215 = vunpack.c.l.b16 %v167
    %v216 = vunpack.c.l.b16 %v168
    %v217 = vunpack.c.l.b16 %v169
    %v218 = vunpack.c.l.b16 %v170
    %v219 = vunpack.c.l.b16 %v171
    %v220 = vunpack.c.l.b16 %v172
    %v221 = vunpack.c.l.b16 %v173
    %v222 = vunpack.c.l.b16 %v174
    %v223 = vunpack.c.l.b16 %v175
    %v224 = vunpack.c.l.b16 %v176
    %v225 = vunpack.c.l.b16 %v177
    %v226 = vunpack.c.l.b16 %v178
    %v227 = vunpack.c.l.b16 %v179
    %v228 = vpack.c.b16 %v213, %v212
    %v229 = vpack.c.b16 %v215, %v214
    %v230 = vpack.c.b16 %v217, %v216
    %v231 = vpack.c.b16 %v219, %v218
    %v232 = vpack.c.b16 %v221, %v220
    %v233 = vpack.c.b16 %v223, %v222
    %v234 = vpack.c.b16 %v225, %v224
    %v235 = vpack.c.b16 %v227, %v226
    %v260 = vunpack.c.l.b16 %v180
    %v261 = vunpack.c.l.b16 %v181
    %v262 = vunpack.c.l.b16 %v182
    %v263 = vunpack.c.l.b16 %v183
    %v264 = vunpack.c.l.b16 %v184
    %v265 = vunpack.c.l.b16 %v185
    %v266 = vunpack.c.l.b16 %v186
    %v267 = vunpack.c.l.b16 %v187
    %v268 = vunpack.c.l.b16 %v188
    %v269 = vunpack.c.l.b16 %v189
    %v270 = vunpack.c.l.b16 %v190
    %v271 = vunpack.c.l.b16 %v191
    %v272 = vunpack.c.l.b16 %v192
    %v273 = vunpack.c.l.b16 %v193
    %v274 = vunpack.c.l.b16 %v194
    %v275 = vunpack.c.l.b16 %v195
    %v276 = vpack.c.b16 %v261, %v260
    %v277 = vpack.c.b16 %v263, %v262
    %v278 = vpack.c.b16 %v265, %v264
    %v279 = vpack.c.b16 %v267, %v266
    %v280 = vpack.c.b16 %v269, %v268
    %v281 = vpack.c.b16 %v271, %v270
    %v282 = vpack.c.b16 %v273, %v272
    %v283 = vpack.c.b16 %v275, %v274
    %292 = vmatpush.bf16.msra.mxu0 %v283
    %293 = vmatpush.bf16.msra.mxu0 %v282
    %294 = vmatpush.bf16.msra.mxu0 %v281
    %295 = vmatpush.bf16.msra.mxu0 %v280
    %296 = vmatpush.bf16.msra.mxu0 %v279
    %297 = vmatpush.bf16.msra.mxu0 %v278
    %298 = vmatpush.bf16.msra.mxu0 %v277
    %299 = vmatpush.bf16.msra.mxu0 %v276
    %300 = vmatmul.bf16.gmra.mxu0 %v228
    %v301 = vpop.f32.mrf.mxu0
    %v302 = vadd.f32 0.0, %v301
    %v303 = vpop.f32.mrf.mxu0
    %v304 = vadd.f32 0.0, %v303
    %305 = vmatmul.bf16.gmra.mxu0 %v229
    %v306 = vpop.f32.mrf.mxu0
    %v307 = vadd.f32 0.0, %v306
    %v308 = vpop.f32.mrf.mxu0
    %v309 = vadd.f32 0.0, %v308
    %310 = vmatmul.bf16.gmra.mxu0 %v230
    %v311 = vpop.f32.mrf.mxu0
    %v312 = vadd.f32 0.0, %v311
    %v313 = vpop.f32.mrf.mxu0
    %v314 = vadd.f32 0.0, %v313
    %315 = vmatmul.bf16.gmra.mxu0 %v231
    %v316 = vpop.f32.mrf.mxu0
    %v317 = vadd.f32 0.0, %v316
    %v318 = vpop.f32.mrf.mxu0
    %v319 = vadd.f32 0.0, %v318
    %320 = vmatmul.bf16.gmra.mxu0 %v232
    %v321 = vpop.f32.mrf.mxu0
    %v322 = vadd.f32 0.0, %v321
    %v323 = vpop.f32.mrf.mxu0
    %v324 = vadd.f32 0.0, %v323
    %325 = vmatmul.bf16.gmra.mxu0 %v233
    %v326 = vpop.f32.mrf.mxu0
    %v327 = vadd.f32 0.0, %v326
    %v328 = vpop.f32.mrf.mxu0
    %v329 = vadd.f32 0.0, %v328
    %330 = vmatmul.bf16.gmra.mxu0 %v234
    %v331 = vpop.f32.mrf.mxu0
    %v332 = vadd.f32 0.0, %v331
    %v333 = vpop.f32.mrf.mxu0
    %v334 = vadd.f32 0.0, %v333
    %335 = vmatmul.bf16.gmra.mxu0 %v235
    %v336 = vpop.f32.mrf.mxu0
    %v337 = vadd.f32 0.0, %v336
    %v338 = vpop.f32.mrf.mxu0
    %v339 = vadd.f32 0.0, %v338
    %340 = vdwg.mxu0
    %v341 = vpack.c.bf16 %v304, %v302
    %v342 = vpack.c.bf16 %v309, %v307
    %v343 = vpack.c.bf16 %v314, %v312
    %v344 = vpack.c.bf16 %v319, %v317
    %v345 = vpack.c.bf16 %v324, %v322
    %v346 = vpack.c.bf16 %v329, %v327
    %v347 = vpack.c.bf16 %v334, %v332
    %v348 = vpack.c.bf16 %v339, %v337
    %v349 = vld [vmem:[#allocation7] sm:$0xf]
    %v350 = vld [vmem:[#allocation7 + $0x4] sm:$0xf]
    %v351 = vld [vmem:[#allocation7 + $0x8] sm:$0xf]
    %v352 = vld [vmem:[#allocation7 + $0xc] sm:$0xf]
    %v353 = vld [vmem:[#allocation7 + $0x10] sm:$0xf]
    %v354 = vld [vmem:[#allocation7 + $0x14] sm:$0xf]
    %v355 = vld [vmem:[#allocation7 + $0x18] sm:$0xf]
    %v356 = vld [vmem:[#allocation7 + $0x1c] sm:$0xf]
    %v357 = vld [vmem:[#allocation7 + $0x20] sm:$0xf]
    %v358 = vld [vmem:[#allocation7 + $0x24] sm:$0xf]
    %v359 = vld [vmem:[#allocation7 + $0x28] sm:$0xf]
    %v360 = vld [vmem:[#allocation7 + $0x2c] sm:$0xf]
    %v361 = vld [vmem:[#allocation7 + $0x30] sm:$0xf]
    %v362 = vld [vmem:[#allocation7 + $0x34] sm:$0xf]
    %v363 = vld [vmem:[#allocation7 + $0x38] sm:$0xf]
    %v364 = vld [vmem:[#allocation7 + $0x3c] sm:$0xf]
    %v365 = vld [vmem:[%s3] sm:$0x1]
    %v367 = vperm.slane %v365, 0
    %v385 = vunpack.c.l.b16 %v349
    %v386 = vunpack.c.l.b16 %v350
    %v387 = vunpack.c.l.b16 %v351
    %v388 = vunpack.c.l.b16 %v352
    %v389 = vunpack.c.l.b16 %v353
    %v390 = vunpack.c.l.b16 %v354
    %v391 = vunpack.c.l.b16 %v355
    %v392 = vunpack.c.l.b16 %v356
    %v393 = vunpack.c.l.b16 %v357
    %v394 = vunpack.c.l.b16 %v358
    %v395 = vunpack.c.l.b16 %v359
    %v396 = vunpack.c.l.b16 %v360
    %v397 = vunpack.c.l.b16 %v361
    %v398 = vunpack.c.l.b16 %v362
    %v399 = vunpack.c.l.b16 %v363
    %v400 = vunpack.c.l.b16 %v364
    %v401 = vpack.c.b16 %v386, %v385
    %v402 = vpack.c.b16 %v388, %v387
    %v403 = vpack.c.b16 %v390, %v389
    %v404 = vpack.c.b16 %v392, %v391
    %v405 = vpack.c.b16 %v394, %v393
    %v406 = vpack.c.b16 %v396, %v395
    %v407 = vpack.c.b16 %v398, %v397
    %v408 = vpack.c.b16 %v400, %v399
    %417 = vmatpush.bf16.msra.mxu0 %v408
    %418 = vmatpush.bf16.msra.mxu0 %v407
    %419 = vmatpush.bf16.msra.mxu0 %v406
    %420 = vmatpush.bf16.msra.mxu0 %v405
    %421 = vmatpush.bf16.msra.mxu0 %v404
    %422 = vmatpush.bf16.msra.mxu0 %v403
    %423 = vmatpush.bf16.msra.mxu0 %v402
    %424 = vmatpush.bf16.msra.mxu0 %v401
    %425 = vmatmul.bf16.gmra.mxu0 %v341
    %v426 = vpop.f32.mrf.mxu0
    %v427 = vadd.f32 %v367, %v426
    %v428 = vpop.f32.mrf.mxu0
    %v429 = vadd.f32 %v367, %v428
    %430 = vmatmul.bf16.gmra.mxu0 %v342
    %v431 = vpop.f32.mrf.mxu0
    %v432 = vadd.f32 %v367, %v431
    %v433 = vpop.f32.mrf.mxu0
    %v434 = vadd.f32 %v367, %v433
    %435 = vmatmul.bf16.gmra.mxu0 %v343
    %v436 = vpop.f32.mrf.mxu0
    %v437 = vadd.f32 %v367, %v436
    %v438 = vpop.f32.mrf.mxu0
    %v439 = vadd.f32 %v367, %v438
    %440 = vmatmul.bf16.gmra.mxu0 %v344
    %v441 = vpop.f32.mrf.mxu0
    %v442 = vadd.f32 %v367, %v441
    %v443 = vpop.f32.mrf.mxu0
    %v444 = vadd.f32 %v367, %v443
    %445 = vmatmul.bf16.gmra.mxu0 %v345
    %v446 = vpop.f32.mrf.mxu0
    %v447 = vadd.f32 %v367, %v446
    %v448 = vpop.f32.mrf.mxu0
    %v449 = vadd.f32 %v367, %v448
    %450 = vmatmul.bf16.gmra.mxu0 %v346
    %v451 = vpop.f32.mrf.mxu0
    %v452 = vadd.f32 %v367, %v451
    %v453 = vpop.f32.mrf.mxu0
    %v454 = vadd.f32 %v367, %v453
    %455 = vmatmul.bf16.gmra.mxu0 %v347
    %v456 = vpop.f32.mrf.mxu0
    %v457 = vadd.f32 %v367, %v456
    %v458 = vpop.f32.mrf.mxu0
    %v459 = vadd.f32 %v367, %v458
    %460 = vmatmul.bf16.gmra.mxu0 %v348
    %v461 = vpop.f32.mrf.mxu0
    %v462 = vadd.f32 %v367, %v461
    %v463 = vpop.f32.mrf.mxu0
    %v464 = vadd.f32 %v367, %v463
    %465 = vdwg.mxu0
    %v466 = vld [vmem:[#allocation8] sm:$0xf]
    %v467 = vld [vmem:[#allocation8 + $0x4] sm:$0xf]
    %v468 = vld [vmem:[#allocation8 + $0x8] sm:$0xf]
    %v469 = vld [vmem:[#allocation8 + $0xc] sm:$0xf]
    %v470 = vld [vmem:[#allocation8 + $0x10] sm:$0xf]
    %v471 = vld [vmem:[#allocation8 + $0x14] sm:$0xf]
    %v472 = vld [vmem:[#allocation8 + $0x18] sm:$0xf]
    %v473 = vld [vmem:[#allocation8 + $0x1c] sm:$0xf]
    %v474 = vld [vmem:[#allocation8 + $0x20] sm:$0xf]
    %v475 = vld [vmem:[#allocation8 + $0x24] sm:$0xf]
    %v476 = vld [vmem:[#allocation8 + $0x28] sm:$0xf]
    %v477 = vld [vmem:[#allocation8 + $0x2c] sm:$0xf]
    %v478 = vld [vmem:[#allocation8 + $0x30] sm:$0xf]
    %v479 = vld [vmem:[#allocation8 + $0x34] sm:$0xf]
    %v480 = vld [vmem:[#allocation8 + $0x38] sm:$0xf]
    %v481 = vld [vmem:[#allocation8 + $0x3c] sm:$0xf]
    %v498 = vunpack.c.l.b16 %v466
    %v499 = vunpack.c.l.b16 %v467
    %v500 = vunpack.c.l.b16 %v468
    %v501 = vunpack.c.l.b16 %v469
    %v502 = vunpack.c.l.b16 %v470
    %v503 = vunpack.c.l.b16 %v471
    %v504 = vunpack.c.l.b16 %v472
    %v505 = vunpack.c.l.b16 %v473
    %v506 = vunpack.c.l.b16 %v474
    %v507 = vunpack.c.l.b16 %v475
    %v508 = vunpack.c.l.b16 %v476
    %v509 = vunpack.c.l.b16 %v477
    %v510 = vunpack.c.l.b16 %v478
    %v511 = vunpack.c.l.b16 %v479
    %v512 = vunpack.c.l.b16 %v480
    %v513 = vunpack.c.l.b16 %v481
    %v514 = vpack.c.b16 %v499, %v498
    %v515 = vpack.c.b16 %v501, %v500
    %v516 = vpack.c.b16 %v503, %v502
    %v517 = vpack.c.b16 %v505, %v504
    %v518 = vpack.c.b16 %v507, %v506
    %v519 = vpack.c.b16 %v509, %v508
    %v520 = vpack.c.b16 %v511, %v510
    %v521 = vpack.c.b16 %v513, %v512
    %530 = vmatpush.bf16.msra.mxu0 %v521
    %531 = vmatpush.bf16.msra.mxu0 %v520
    %532 = vmatpush.bf16.msra.mxu0 %v519
    %533 = vmatpush.bf16.msra.mxu0 %v518
    %534 = vmatpush.bf16.msra.mxu0 %v517
    %535 = vmatpush.bf16.msra.mxu0 %v516
    %536 = vmatpush.bf16.msra.mxu0 %v515
    %537 = vmatpush.bf16.msra.mxu0 %v514
    %538 = vmatmul.bf16.gmra.mxu0 %v276
    %v539 = vpop.f32.mrf.mxu0
    %v540 = vadd.f32 0.0, %v539
    %v541 = vpop.f32.mrf.mxu0
    %v542 = vadd.f32 0.0, %v541
    %543 = vmatmul.bf16.gmra.mxu0 %v277
    %v544 = vpop.f32.mrf.mxu0
    %v545 = vadd.f32 0.0, %v544
    %v546 = vpop.f32.mrf.mxu0
    %v547 = vadd.f32 0.0, %v546
    %548 = vmatmul.bf16.gmra.mxu0 %v278
    %v549 = vpop.f32.mrf.mxu0
    %v550 = vadd.f32 0.0, %v549
    %v551 = vpop.f32.mrf.mxu0
    %v552 = vadd.f32 0.0, %v551
    %553 = vmatmul.bf16.gmra.mxu0 %v279
    %v554 = vpop.f32.mrf.mxu0
    %v555 = vadd.f32 0.0, %v554
    %v556 = vpop.f32.mrf.mxu0
    %v557 = vadd.f32 0.0, %v556
    %558 = vmatmul.bf16.gmra.mxu0 %v280
    %v559 = vpop.f32.mrf.mxu0
    %v560 = vadd.f32 0.0, %v559
    %v561 = vpop.f32.mrf.mxu0
    %v562 = vadd.f32 0.0, %v561
    %563 = vmatmul.bf16.gmra.mxu0 %v281
    %v564 = vpop.f32.mrf.mxu0
    %v565 = vadd.f32 0.0, %v564
    %v566 = vpop.f32.mrf.mxu0
    %v567 = vadd.f32 0.0, %v566
    %568 = vmatmul.bf16.gmra.mxu0 %v282
    %v569 = vpop.f32.mrf.mxu0
    %v570 = vadd.f32 0.0, %v569
    %v571 = vpop.f32.mrf.mxu0
    %v572 = vadd.f32 0.0, %v571
    %573 = vmatmul.bf16.gmra.mxu0 %v283
    %v574 = vpop.f32.mrf.mxu0
    %v575 = vadd.f32 0.0, %v574
    %v576 = vpop.f32.mrf.mxu0
    %v577 = vadd.f32 0.0, %v576
    %578 = vdwg.mxu0
    %v579 = vadd.f32 %v427, %v540
    %v580 = vadd.f32 %v429, %v542
    %v581 = vadd.f32 %v432, %v545
    %v582 = vadd.f32 %v434, %v547
    %v583 = vadd.f32 %v437, %v550
    %v584 = vadd.f32 %v439, %v552
    %v585 = vadd.f32 %v442, %v555
    %v586 = vadd.f32 %v444, %v557
    %v587 = vadd.f32 %v447, %v560
    %v588 = vadd.f32 %v449, %v562
    %v589 = vadd.f32 %v452, %v565
    %v590 = vadd.f32 %v454, %v567
    %v591 = vadd.f32 %v457, %v570
    %v592 = vadd.f32 %v459, %v572
    %v593 = vadd.f32 %v462, %v575
    %v594 = vadd.f32 %v464, %v577
    %v595 = vmax.f32 %v579, 0.0
    %v596 = vmax.f32 %v580, 0.0
    %v597 = vmax.f32 %v581, 0.0
    %v598 = vmax.f32 %v582, 0.0
    %v599 = vmax.f32 %v583, 0.0
    %v600 = vmax.f32 %v584, 0.0
    %v601 = vmax.f32 %v585, 0.0
    %v602 = vmax.f32 %v586, 0.0
    %v603 = vmax.f32 %v587, 0.0
    %v604 = vmax.f32 %v588, 0.0
    %v605 = vmax.f32 %v589, 0.0
    %v606 = vmax.f32 %v590, 0.0
    %v607 = vmax.f32 %v591, 0.0
    %v608 = vmax.f32 %v592, 0.0
    %v609 = vmax.f32 %v593, 0.0
    %v610 = vmax.f32 %v594, 0.0
    %v611 = vpack.c.bf16 %v596, %v595
    %v612 = vpack.c.bf16 %v598, %v597
    %v613 = vpack.c.bf16 %v600, %v599
    %v614 = vpack.c.bf16 %v602, %v601
    %v615 = vpack.c.bf16 %v604, %v603
    %v616 = vpack.c.bf16 %v606, %v605
    %v617 = vpack.c.bf16 %v608, %v607
    %v618 = vpack.c.bf16 %v610, %v609
    %619 = vmatpush.bf16.msra.mxu0 %v618
    %620 = vmatpush.bf16.msra.mxu0 %v617
    %621 = vmatpush.bf16.msra.mxu0 %v616
    %622 = vmatpush.bf16.msra.mxu0 %v615
    %623 = vmatpush.bf16.msra.mxu0 %v614
    %624 = vmatpush.bf16.msra.mxu0 %v613
    %625 = vmatpush.bf16.msra.mxu0 %v612
    %626 = vmatpush.bf16.msra.mxu0 %v611
    %627 = vmatmul.bf16.gmra.mxu0 %v228
    %v628 = vpop.f32.mrf.mxu0
    %v629 = vadd.f32 0.0, %v628
    %v630 = vpop.f32.mrf.mxu0
    %v631 = vadd.f32 0.0, %v630
    %632 = vmatmul.bf16.gmra.mxu0 %v229
    %v633 = vpop.f32.mrf.mxu0
    %v634 = vadd.f32 0.0, %v633
    %v635 = vpop.f32.mrf.mxu0
    %v636 = vadd.f32 0.0, %v635
    %637 = vmatmul.bf16.gmra.mxu0 %v230
    %v638 = vpop.f32.mrf.mxu0
    %v639 = vadd.f32 0.0, %v638
    %v640 = vpop.f32.mrf.mxu0
    %v641 = vadd.f32 0.0, %v640
    %642 = vmatmul.bf16.gmra.mxu0 %v231
    %v643 = vpop.f32.mrf.mxu0
    %v644 = vadd.f32 0.0, %v643
    %v645 = vpop.f32.mrf.mxu0
    %v646 = vadd.f32 0.0, %v645
    %647 = vmatmul.bf16.gmra.mxu0 %v232
    %v648 = vpop.f32.mrf.mxu0
    %v649 = vadd.f32 0.0, %v648
    %v650 = vpop.f32.mrf.mxu0
    %v651 = vadd.f32 0.0, %v650
    %652 = vmatmul.bf16.gmra.mxu0 %v233
    %v653 = vpop.f32.mrf.mxu0
    %v654 = vadd.f32 0.0, %v653
    %v655 = vpop.f32.mrf.mxu0
    %v656 = vadd.f32 0.0, %v655
    %657 = vmatmul.bf16.gmra.mxu0 %v234
    %v658 = vpop.f32.mrf.mxu0
    %v659 = vadd.f32 0.0, %v658
    %v660 = vpop.f32.mrf.mxu0
    %v661 = vadd.f32 0.0, %v660
    %662 = vmatmul.bf16.gmra.mxu0 %v235
    %v663 = vpop.f32.mrf.mxu0
    %v664 = vadd.f32 0.0, %v663
    %v665 = vpop.f32.mrf.mxu0
    %v666 = vadd.f32 0.0, %v665
    %667 = vdwg.mxu0
    %v668 = vpack.c.bf16 %v631, %v629
    %v669 = vpack.c.bf16 %v636, %v634
    %v670 = vpack.c.bf16 %v641, %v639
    %v671 = vpack.c.bf16 %v646, %v644
    %v672 = vpack.c.bf16 %v651, %v649
    %v673 = vpack.c.bf16 %v656, %v654
    %v674 = vpack.c.bf16 %v661, %v659
    %v675 = vpack.c.bf16 %v666, %v664
    %v676 = vld [vmem:[#allocation10] sm:$0xf]
    %v677 = vld [vmem:[#allocation10 + $0x4] sm:$0xf]
    %v678 = vld [vmem:[#allocation10 + $0x8] sm:$0xf]
    %v679 = vld [vmem:[#allocation10 + $0xc] sm:$0xf]
    %v680 = vld [vmem:[#allocation10 + $0x10] sm:$0xf]
    %v681 = vld [vmem:[#allocation10 + $0x14] sm:$0xf]
    %v682 = vld [vmem:[#allocation10 + $0x18] sm:$0xf]
    %v683 = vld [vmem:[#allocation10 + $0x1c] sm:$0xf]
    %v684 = vld [vmem:[#allocation10 + $0x20] sm:$0xf]
    %v685 = vld [vmem:[#allocation10 + $0x24] sm:$0xf]
    %v686 = vld [vmem:[#allocation10 + $0x28] sm:$0xf]
    %v687 = vld [vmem:[#allocation10 + $0x2c] sm:$0xf]
    %v688 = vld [vmem:[#allocation10 + $0x30] sm:$0xf]
    %v689 = vld [vmem:[#allocation10 + $0x34] sm:$0xf]
    %v690 = vld [vmem:[#allocation10 + $0x38] sm:$0xf]
    %v691 = vld [vmem:[#allocation10 + $0x3c] sm:$0xf]
    %v692 = vld [vmem:[%s6] sm:$0x1]
    %v694 = vperm.slane %v692, 0
    %v712 = vunpack.c.l.b16 %v676
    %v713 = vunpack.c.l.b16 %v677
    %v714 = vunpack.c.l.b16 %v678
    %v715 = vunpack.c.l.b16 %v679
    %v716 = vunpack.c.l.b16 %v680
    %v717 = vunpack.c.l.b16 %v681
    %v718 = vunpack.c.l.b16 %v682
    %v719 = vunpack.c.l.b16 %v683
    %v720 = vunpack.c.l.b16 %v684
    %v721 = vunpack.c.l.b16 %v685
    %v722 = vunpack.c.l.b16 %v686
    %v723 = vunpack.c.l.b16 %v687
    %v724 = vunpack.c.l.b16 %v688
    %v725 = vunpack.c.l.b16 %v689
    %v726 = vunpack.c.l.b16 %v690
    %v727 = vunpack.c.l.b16 %v691
    %v728 = vpack.c.b16 %v713, %v712
    %v729 = vpack.c.b16 %v715, %v714
    %v730 = vpack.c.b16 %v717, %v716
    %v731 = vpack.c.b16 %v719, %v718
    %v732 = vpack.c.b16 %v721, %v720
    %v733 = vpack.c.b16 %v723, %v722
    %v734 = vpack.c.b16 %v725, %v724
    %v735 = vpack.c.b16 %v727, %v726
    %744 = vmatpush.bf16.msra.mxu0 %v735
    %745 = vmatpush.bf16.msra.mxu0 %v734
    %746 = vmatpush.bf16.msra.mxu0 %v733
    %747 = vmatpush.bf16.msra.mxu0 %v732
    %748 = vmatpush.bf16.msra.mxu0 %v731
    %749 = vmatpush.bf16.msra.mxu0 %v730
    %750 = vmatpush.bf16.msra.mxu0 %v729
    %751 = vmatpush.bf16.msra.mxu0 %v728
    %752 = vmatmul.bf16.gmra.mxu0 %v668
    %v753 = vpop.f32.mrf.mxu0
    %v754 = vadd.f32 %v694, %v753
    %v755 = vpop.f32.mrf.mxu0
    %v756 = vadd.f32 %v694, %v755
    %757 = vmatmul.bf16.gmra.mxu0 %v669
    %v758 = vpop.f32.mrf.mxu0
    %v759 = vadd.f32 %v694, %v758
    %v760 = vpop.f32.mrf.mxu0
    %v761 = vadd.f32 %v694, %v760
    %762 = vmatmul.bf16.gmra.mxu0 %v670
    %v763 = vpop.f32.mrf.mxu0
    %v764 = vadd.f32 %v694, %v763
    %v765 = vpop.f32.mrf.mxu0
    %v766 = vadd.f32 %v694, %v765
    %767 = vmatmul.bf16.gmra.mxu0 %v671
    %v768 = vpop.f32.mrf.mxu0
    %v769 = vadd.f32 %v694, %v768
    %v770 = vpop.f32.mrf.mxu0
    %v771 = vadd.f32 %v694, %v770
    %772 = vmatmul.bf16.gmra.mxu0 %v672
    %v773 = vpop.f32.mrf.mxu0
    %v774 = vadd.f32 %v694, %v773
    %v775 = vpop.f32.mrf.mxu0
    %v776 = vadd.f32 %v694, %v775
    %777 = vmatmul.bf16.gmra.mxu0 %v673
    %v778 = vpop.f32.mrf.mxu0
    %v779 = vadd.f32 %v694, %v778
    %v780 = vpop.f32.mrf.mxu0
    %v781 = vadd.f32 %v694, %v780
    %782 = vmatmul.bf16.gmra.mxu0 %v674
    %v783 = vpop.f32.mrf.mxu0
    %v784 = vadd.f32 %v694, %v783
    %v785 = vpop.f32.mrf.mxu0
    %v786 = vadd.f32 %v694, %v785
    %787 = vmatmul.bf16.gmra.mxu0 %v675
    %v788 = vpop.f32.mrf.mxu0
    %v789 = vadd.f32 %v694, %v788
    %v790 = vpop.f32.mrf.mxu0
    %v791 = vadd.f32 %v694, %v790
    %792 = vdwg.mxu0
    %v793 = vld [vmem:[#allocation11] sm:$0xf]
    %v794 = vld [vmem:[#allocation11 + $0x4] sm:$0xf]
    %v795 = vld [vmem:[#allocation11 + $0x8] sm:$0xf]
    %v796 = vld [vmem:[#allocation11 + $0xc] sm:$0xf]
    %v797 = vld [vmem:[#allocation11 + $0x10] sm:$0xf]
    %v798 = vld [vmem:[#allocation11 + $0x14] sm:$0xf]
    %v799 = vld [vmem:[#allocation11 + $0x18] sm:$0xf]
    %v800 = vld [vmem:[#allocation11 + $0x1c] sm:$0xf]
    %v801 = vld [vmem:[#allocation11 + $0x20] sm:$0xf]
    %v802 = vld [vmem:[#allocation11 + $0x24] sm:$0xf]
    %v803 = vld [vmem:[#allocation11 + $0x28] sm:$0xf]
    %v804 = vld [vmem:[#allocation11 + $0x2c] sm:$0xf]
    %v805 = vld [vmem:[#allocation11 + $0x30] sm:$0xf]
    %v806 = vld [vmem:[#allocation11 + $0x34] sm:$0xf]
    %v807 = vld [vmem:[#allocation11 + $0x38] sm:$0xf]
    %v808 = vld [vmem:[#allocation11 + $0x3c] sm:$0xf]
    %v825 = vunpack.c.l.b16 %v793
    %v826 = vunpack.c.l.b16 %v794
    %v827 = vunpack.c.l.b16 %v795
    %v828 = vunpack.c.l.b16 %v796
    %v829 = vunpack.c.l.b16 %v797
    %v830 = vunpack.c.l.b16 %v798
    %v831 = vunpack.c.l.b16 %v799
    %v832 = vunpack.c.l.b16 %v800
    %v833 = vunpack.c.l.b16 %v801
    %v834 = vunpack.c.l.b16 %v802
    %v835 = vunpack.c.l.b16 %v803
    %v836 = vunpack.c.l.b16 %v804
    %v837 = vunpack.c.l.b16 %v805
    %v838 = vunpack.c.l.b16 %v806
    %v839 = vunpack.c.l.b16 %v807
    %v840 = vunpack.c.l.b16 %v808
    %v841 = vpack.c.b16 %v826, %v825
    %v842 = vpack.c.b16 %v828, %v827
    %v843 = vpack.c.b16 %v830, %v829
    %v844 = vpack.c.b16 %v832, %v831
    %v845 = vpack.c.b16 %v834, %v833
    %v846 = vpack.c.b16 %v836, %v835
    %v847 = vpack.c.b16 %v838, %v837
    %v848 = vpack.c.b16 %v840, %v839
    %857 = vmatpush.bf16.msra.mxu0 %v848
    %858 = vmatpush.bf16.msra.mxu0 %v847
    %859 = vmatpush.bf16.msra.mxu0 %v846
    %860 = vmatpush.bf16.msra.mxu0 %v845
    %861 = vmatpush.bf16.msra.mxu0 %v844
    %862 = vmatpush.bf16.msra.mxu0 %v843
    %863 = vmatpush.bf16.msra.mxu0 %v842
    %864 = vmatpush.bf16.msra.mxu0 %v841
    %865 = vmatmul.bf16.gmra.mxu0 %v611
    %v866 = vpop.f32.mrf.mxu0
    %v867 = vadd.f32 0.0, %v866
    %v868 = vpop.f32.mrf.mxu0
    %v869 = vadd.f32 0.0, %v868
    %870 = vmatmul.bf16.gmra.mxu0 %v612
    %v871 = vpop.f32.mrf.mxu0
    %v872 = vadd.f32 0.0, %v871
    %v873 = vpop.f32.mrf.mxu0
    %v874 = vadd.f32 0.0, %v873
    %875 = vmatmul.bf16.gmra.mxu0 %v613
    %v876 = vpop.f32.mrf.mxu0
    %v877 = vadd.f32 0.0, %v876
    %v878 = vpop.f32.mrf.mxu0
    %v879 = vadd.f32 0.0, %v878
    %880 = vmatmul.bf16.gmra.mxu0 %v614
    %v881 = vpop.f32.mrf.mxu0
    %v882 = vadd.f32 0.0, %v881
    %v883 = vpop.f32.mrf.mxu0
    %v884 = vadd.f32 0.0, %v883
    %885 = vmatmul.bf16.gmra.mxu0 %v615
    %v886 = vpop.f32.mrf.mxu0
    %v887 = vadd.f32 0.0, %v886
    %v888 = vpop.f32.mrf.mxu0
    %v889 = vadd.f32 0.0, %v888
    %890 = vmatmul.bf16.gmra.mxu0 %v616
    %v891 = vpop.f32.mrf.mxu0
    %v892 = vadd.f32 0.0, %v891
    %v893 = vpop.f32.mrf.mxu0
    %v894 = vadd.f32 0.0, %v893
    %895 = vmatmul.bf16.gmra.mxu0 %v617
    %v896 = vpop.f32.mrf.mxu0
    %v897 = vadd.f32 0.0, %v896
    %v898 = vpop.f32.mrf.mxu0
    %v899 = vadd.f32 0.0, %v898
    %900 = vmatmul.bf16.gmra.mxu0 %v618
    %v901 = vpop.f32.mrf.mxu0
    %v902 = vadd.f32 0.0, %v901
    %v903 = vpop.f32.mrf.mxu0
    %v904 = vadd.f32 0.0, %v903
    %905 = vdwg.mxu0
    %v906 = vadd.f32 %v754, %v867
    %v907 = vadd.f32 %v756, %v869
    %v908 = vadd.f32 %v759, %v872
    %v909 = vadd.f32 %v761, %v874
    %v910 = vadd.f32 %v764, %v877
    %v911 = vadd.f32 %v766, %v879
    %v912 = vadd.f32 %v769, %v882
    %v913 = vadd.f32 %v771, %v884
    %v914 = vadd.f32 %v774, %v887
    %v915 = vadd.f32 %v776, %v889
    %v916 = vadd.f32 %v779, %v892
    %v917 = vadd.f32 %v781, %v894
    %v918 = vadd.f32 %v784, %v897
    %v919 = vadd.f32 %v786, %v899
    %v920 = vadd.f32 %v789, %v902
    %v921 = vadd.f32 %v791, %v904
    %v922 = vmax.f32 %v906, 0.0
    %v923 = vmax.f32 %v907, 0.0
    %v924 = vmax.f32 %v908, 0.0
    %v925 = vmax.f32 %v909, 0.0
    %v926 = vmax.f32 %v910, 0.0
    %v927 = vmax.f32 %v911, 0.0
    %v928 = vmax.f32 %v912, 0.0
    %v929 = vmax.f32 %v913, 0.0
    %v930 = vmax.f32 %v914, 0.0
    %v931 = vmax.f32 %v915, 0.0
    %v932 = vmax.f32 %v916, 0.0
    %v933 = vmax.f32 %v917, 0.0
    %v934 = vmax.f32 %v918, 0.0
    %v935 = vmax.f32 %v919, 0.0
    %v936 = vmax.f32 %v920, 0.0
    %v937 = vmax.f32 %v921, 0.0
    %v938 = vpack.c.bf16 %v923, %v922
    %v939 = vpack.c.bf16 %v925, %v924
    %v940 = vpack.c.bf16 %v927, %v926
    %v941 = vpack.c.bf16 %v929, %v928
    %v942 = vpack.c.bf16 %v931, %v930
    %v943 = vpack.c.bf16 %v933, %v932
    %v944 = vpack.c.bf16 %v935, %v934
    %v945 = vpack.c.bf16 %v937, %v936
    %946 = vmatpush.bf16.msra.mxu0 %v945
    %947 = vmatpush.bf16.msra.mxu0 %v944
    %948 = vmatpush.bf16.msra.mxu0 %v943
    %949 = vmatpush.bf16.msra.mxu0 %v942
    %950 = vmatpush.bf16.msra.mxu0 %v941
    %951 = vmatpush.bf16.msra.mxu0 %v940
    %952 = vmatpush.bf16.msra.mxu0 %v939
    %953 = vmatpush.bf16.msra.mxu0 %v938
    %954 = vmatmul.bf16.gmra.mxu0 %v228
    %v955 = vpop.f32.mrf.mxu0
    %v956 = vadd.f32 0.0, %v955
    %v957 = vpop.f32.mrf.mxu0
    %v958 = vadd.f32 0.0, %v957
    %959 = vmatmul.bf16.gmra.mxu0 %v229
    %v960 = vpop.f32.mrf.mxu0
    %v961 = vadd.f32 0.0, %v960
    %v962 = vpop.f32.mrf.mxu0
    %v963 = vadd.f32 0.0, %v962
    %964 = vmatmul.bf16.gmra.mxu0 %v230
    %v965 = vpop.f32.mrf.mxu0
    %v966 = vadd.f32 0.0, %v965
    %v967 = vpop.f32.mrf.mxu0
    %v968 = vadd.f32 0.0, %v967
    %969 = vmatmul.bf16.gmra.mxu0 %v231
    %v970 = vpop.f32.mrf.mxu0
    %v971 = vadd.f32 0.0, %v970
    %v972 = vpop.f32.mrf.mxu0
    %v973 = vadd.f32 0.0, %v972
    %974 = vmatmul.bf16.gmra.mxu0 %v232
    %v975 = vpop.f32.mrf.mxu0
    %v976 = vadd.f32 0.0, %v975
    %v977 = vpop.f32.mrf.mxu0
    %v978 = vadd.f32 0.0, %v977
    %979 = vmatmul.bf16.gmra.mxu0 %v233
    %v980 = vpop.f32.mrf.mxu0
    %v981 = vadd.f32 0.0, %v980
    %v982 = vpop.f32.mrf.mxu0
    %v983 = vadd.f32 0.0, %v982
    %984 = vmatmul.bf16.gmra.mxu0 %v234
    %v985 = vpop.f32.mrf.mxu0
    %v986 = vadd.f32 0.0, %v985
    %v987 = vpop.f32.mrf.mxu0
    %v988 = vadd.f32 0.0, %v987
    %989 = vmatmul.bf16.gmra.mxu0 %v235
    %v990 = vpop.f32.mrf.mxu0
    %v991 = vadd.f32 0.0, %v990
    %v992 = vpop.f32.mrf.mxu0
    %v993 = vadd.f32 0.0, %v992
    %994 = vdwg.mxu0
    %v995 = vpack.c.bf16 %v958, %v956
    %v996 = vpack.c.bf16 %v963, %v961
    %v997 = vpack.c.bf16 %v968, %v966
    %v998 = vpack.c.bf16 %v973, %v971
    %v999 = vpack.c.bf16 %v978, %v976
    %v1000 = vpack.c.bf16 %v983, %v981
    %v1001 = vpack.c.bf16 %v988, %v986
    %v1002 = vpack.c.bf16 %v993, %v991
    %v1003 = vld [vmem:[#allocation13] sm:$0xf]
    %v1004 = vld [vmem:[#allocation13 + $0x4] sm:$0xf]
    %v1005 = vld [vmem:[#allocation13 + $0x8] sm:$0xf]
    %v1006 = vld [vmem:[#allocation13 + $0xc] sm:$0xf]
    %v1007 = vld [vmem:[#allocation13 + $0x10] sm:$0xf]
    %v1008 = vld [vmem:[#allocation13 + $0x14] sm:$0xf]
    %v1009 = vld [vmem:[#allocation13 + $0x18] sm:$0xf]
    %v1010 = vld [vmem:[#allocation13 + $0x1c] sm:$0xf]
    %v1011 = vld [vmem:[#allocation13 + $0x20] sm:$0xf]
    %v1012 = vld [vmem:[#allocation13 + $0x24] sm:$0xf]
    %v1013 = vld [vmem:[#allocation13 + $0x28] sm:$0xf]
    %v1014 = vld [vmem:[#allocation13 + $0x2c] sm:$0xf]
    %v1015 = vld [vmem:[#allocation13 + $0x30] sm:$0xf]
    %v1016 = vld [vmem:[#allocation13 + $0x34] sm:$0xf]
    %v1017 = vld [vmem:[#allocation13 + $0x38] sm:$0xf]
    %v1018 = vld [vmem:[#allocation13 + $0x3c] sm:$0xf]
    %v1019 = vld [vmem:[%s9] sm:$0x1]
    %v1021 = vperm.slane %v1019, 0
    %v1039 = vunpack.c.l.b16 %v1003
    %v1040 = vunpack.c.l.b16 %v1004
    %v1041 = vunpack.c.l.b16 %v1005
    %v1042 = vunpack.c.l.b16 %v1006
    %v1043 = vunpack.c.l.b16 %v1007
    %v1044 = vunpack.c.l.b16 %v1008
    %v1045 = vunpack.c.l.b16 %v1009
    %v1046 = vunpack.c.l.b16 %v1010
    %v1047 = vunpack.c.l.b16 %v1011
    %v1048 = vunpack.c.l.b16 %v1012
    %v1049 = vunpack.c.l.b16 %v1013
    %v1050 = vunpack.c.l.b16 %v1014
    %v1051 = vunpack.c.l.b16 %v1015
    %v1052 = vunpack.c.l.b16 %v1016
    %v1053 = vunpack.c.l.b16 %v1017
    %v1054 = vunpack.c.l.b16 %v1018
    %v1055 = vpack.c.b16 %v1040, %v1039
    %v1056 = vpack.c.b16 %v1042, %v1041
    %v1057 = vpack.c.b16 %v1044, %v1043
    %v1058 = vpack.c.b16 %v1046, %v1045
    %v1059 = vpack.c.b16 %v1048, %v1047
    %v1060 = vpack.c.b16 %v1050, %v1049
    %v1061 = vpack.c.b16 %v1052, %v1051
    %v1062 = vpack.c.b16 %v1054, %v1053
    %1071 = vmatpush.bf16.msra.mxu0 %v1062
    %1072 = vmatpush.bf16.msra.mxu0 %v1061
    %1073 = vmatpush.bf16.msra.mxu0 %v1060
    %1074 = vmatpush.bf16.msra.mxu0 %v1059
    %1075 = vmatpush.bf16.msra.mxu0 %v1058
    %1076 = vmatpush.bf16.msra.mxu0 %v1057
    %1077 = vmatpush.bf16.msra.mxu0 %v1056
    %1078 = vmatpush.bf16.msra.mxu0 %v1055
    %1079 = vmatmul.bf16.gmra.mxu0 %v995
    %v1080 = vpop.f32.mrf.mxu0
    %v1081 = vadd.f32 %v1021, %v1080
    %v1082 = vpop.f32.mrf.mxu0
    %v1083 = vadd.f32 %v1021, %v1082
    %1084 = vmatmul.bf16.gmra.mxu0 %v996
    %v1085 = vpop.f32.mrf.mxu0
    %v1086 = vadd.f32 %v1021, %v1085
    %v1087 = vpop.f32.mrf.mxu0
    %v1088 = vadd.f32 %v1021, %v1087
    %1089 = vmatmul.bf16.gmra.mxu0 %v997
    %v1090 = vpop.f32.mrf.mxu0
    %v1091 = vadd.f32 %v1021, %v1090
    %v1092 = vpop.f32.mrf.mxu0
    %v1093 = vadd.f32 %v1021, %v1092
    %1094 = vmatmul.bf16.gmra.mxu0 %v998
    %v1095 = vpop.f32.mrf.mxu0
    %v1096 = vadd.f32 %v1021, %v1095
    %v1097 = vpop.f32.mrf.mxu0
    %v1098 = vadd.f32 %v1021, %v1097
    %1099 = vmatmul.bf16.gmra.mxu0 %v999
    %v1100 = vpop.f32.mrf.mxu0
    %v1101 = vadd.f32 %v1021, %v1100
    %v1102 = vpop.f32.mrf.mxu0
    %v1103 = vadd.f32 %v1021, %v1102
    %1104 = vmatmul.bf16.gmra.mxu0 %v1000
    %v1105 = vpop.f32.mrf.mxu0
    %v1106 = vadd.f32 %v1021, %v1105
    %v1107 = vpop.f32.mrf.mxu0
    %v1108 = vadd.f32 %v1021, %v1107
    %1109 = vmatmul.bf16.gmra.mxu0 %v1001
    %v1110 = vpop.f32.mrf.mxu0
    %v1111 = vadd.f32 %v1021, %v1110
    %v1112 = vpop.f32.mrf.mxu0
    %v1113 = vadd.f32 %v1021, %v1112
    %1114 = vmatmul.bf16.gmra.mxu0 %v1002
    %v1115 = vpop.f32.mrf.mxu0
    %v1116 = vadd.f32 %v1021, %v1115
    %v1117 = vpop.f32.mrf.mxu0
    %v1118 = vadd.f32 %v1021, %v1117
    %1119 = vdwg.mxu0
    %v1120 = vld [vmem:[#allocation14] sm:$0xf]
    %v1121 = vld [vmem:[#allocation14 + $0x4] sm:$0xf]
    %v1122 = vld [vmem:[#allocation14 + $0x8] sm:$0xf]
    %v1123 = vld [vmem:[#allocation14 + $0xc] sm:$0xf]
    %v1124 = vld [vmem:[#allocation14 + $0x10] sm:$0xf]
    %v1125 = vld [vmem:[#allocation14 + $0x14] sm:$0xf]
    %v1126 = vld [vmem:[#allocation14 + $0x18] sm:$0xf]
    %v1127 = vld [vmem:[#allocation14 + $0x1c] sm:$0xf]
    %v1128 = vld [vmem:[#allocation14 + $0x20] sm:$0xf]
    %v1129 = vld [vmem:[#allocation14 + $0x24] sm:$0xf]
    %v1130 = vld [vmem:[#allocation14 + $0x28] sm:$0xf]
    %v1131 = vld [vmem:[#allocation14 + $0x2c] sm:$0xf]
    %v1132 = vld [vmem:[#allocation14 + $0x30] sm:$0xf]
    %v1133 = vld [vmem:[#allocation14 + $0x34] sm:$0xf]
    %v1134 = vld [vmem:[#allocation14 + $0x38] sm:$0xf]
    %v1135 = vld [vmem:[#allocation14 + $0x3c] sm:$0xf]
    %v1152 = vunpack.c.l.b16 %v1120
    %v1153 = vunpack.c.l.b16 %v1121
    %v1154 = vunpack.c.l.b16 %v1122
    %v1155 = vunpack.c.l.b16 %v1123
    %v1156 = vunpack.c.l.b16 %v1124
    %v1157 = vunpack.c.l.b16 %v1125
    %v1158 = vunpack.c.l.b16 %v1126
    %v1159 = vunpack.c.l.b16 %v1127
    %v1160 = vunpack.c.l.b16 %v1128
    %v1161 = vunpack.c.l.b16 %v1129
    %v1162 = vunpack.c.l.b16 %v1130
    %v1163 = vunpack.c.l.b16 %v1131
    %v1164 = vunpack.c.l.b16 %v1132
    %v1165 = vunpack.c.l.b16 %v1133
    %v1166 = vunpack.c.l.b16 %v1134
    %v1167 = vunpack.c.l.b16 %v1135
    %v1168 = vpack.c.b16 %v1153, %v1152
    %v1169 = vpack.c.b16 %v1155, %v1154
    %v1170 = vpack.c.b16 %v1157, %v1156
    %v1171 = vpack.c.b16 %v1159, %v1158
    %v1172 = vpack.c.b16 %v1161, %v1160
    %v1173 = vpack.c.b16 %v1163, %v1162
    %v1174 = vpack.c.b16 %v1165, %v1164
    %v1175 = vpack.c.b16 %v1167, %v1166
    %1184 = vmatpush.bf16.msra.mxu0 %v1175
    %1185 = vmatpush.bf16.msra.mxu0 %v1174
    %1186 = vmatpush.bf16.msra.mxu0 %v1173
    %1187 = vmatpush.bf16.msra.mxu0 %v1172
    %1188 = vmatpush.bf16.msra.mxu0 %v1171
    %1189 = vmatpush.bf16.msra.mxu0 %v1170
    %1190 = vmatpush.bf16.msra.mxu0 %v1169
    %1191 = vmatpush.bf16.msra.mxu0 %v1168
    %1192 = vmatmul.bf16.gmra.mxu0 %v938
    %v1193 = vpop.f32.mrf.mxu0
    %v1194 = vadd.f32 0.0, %v1193
    %v1195 = vpop.f32.mrf.mxu0
    %v1196 = vadd.f32 0.0, %v1195
    %1197 = vmatmul.bf16.gmra.mxu0 %v939
    %v1198 = vpop.f32.mrf.mxu0
    %v1199 = vadd.f32 0.0, %v1198
    %v1200 = vpop.f32.mrf.mxu0
    %v1201 = vadd.f32 0.0, %v1200
    %1202 = vmatmul.bf16.gmra.mxu0 %v940
    %v1203 = vpop.f32.mrf.mxu0
    %v1204 = vadd.f32 0.0, %v1203
    %v1205 = vpop.f32.mrf.mxu0
    %v1206 = vadd.f32 0.0, %v1205
    %1207 = vmatmul.bf16.gmra.mxu0 %v941
    %v1208 = vpop.f32.mrf.mxu0
    %v1209 = vadd.f32 0.0, %v1208
    %v1210 = vpop.f32.mrf.mxu0
    %v1211 = vadd.f32 0.0, %v1210
    %1212 = vmatmul.bf16.gmra.mxu0 %v942
    %v1213 = vpop.f32.mrf.mxu0
    %v1214 = vadd.f32 0.0, %v1213
    %v1215 = vpop.f32.mrf.mxu0
    %v1216 = vadd.f32 0.0, %v1215
    %1217 = vmatmul.bf16.gmra.mxu0 %v943
    %v1218 = vpop.f32.mrf.mxu0
    %v1219 = vadd.f32 0.0, %v1218
    %v1220 = vpop.f32.mrf.mxu0
    %v1221 = vadd.f32 0.0, %v1220
    %1222 = vmatmul.bf16.gmra.mxu0 %v944
    %v1223 = vpop.f32.mrf.mxu0
    %v1224 = vadd.f32 0.0, %v1223
    %v1225 = vpop.f32.mrf.mxu0
    %v1226 = vadd.f32 0.0, %v1225
    %1227 = vmatmul.bf16.gmra.mxu0 %v945
    %v1228 = vpop.f32.mrf.mxu0
    %v1229 = vadd.f32 0.0, %v1228
    %v1230 = vpop.f32.mrf.mxu0
    %v1231 = vadd.f32 0.0, %v1230
    %1232 = vdwg.mxu0
    %v1233 = vadd.f32 %v1081, %v1194
    %v1234 = vadd.f32 %v1083, %v1196
    %v1235 = vadd.f32 %v1086, %v1199
    %v1236 = vadd.f32 %v1088, %v1201
    %v1237 = vadd.f32 %v1091, %v1204
    %v1238 = vadd.f32 %v1093, %v1206
    %v1239 = vadd.f32 %v1096, %v1209
    %v1240 = vadd.f32 %v1098, %v1211
    %v1241 = vadd.f32 %v1101, %v1214
    %v1242 = vadd.f32 %v1103, %v1216
    %v1243 = vadd.f32 %v1106, %v1219
    %v1244 = vadd.f32 %v1108, %v1221
    %v1245 = vadd.f32 %v1111, %v1224
    %v1246 = vadd.f32 %v1113, %v1226
    %v1247 = vadd.f32 %v1116, %v1229
    %v1248 = vadd.f32 %v1118, %v1231
    %1249 = vst [vmem:[#allocation16] sm:$0xff] %v1233
    %1250 = vst [vmem:[#allocation16 + $0x8] sm:$0xff] %v1234
    %1251 = vst [vmem:[#allocation16 + $0x10] sm:$0xff] %v1235
    %1252 = vst [vmem:[#allocation16 + $0x18] sm:$0xff] %v1236
    %1253 = vst [vmem:[#allocation16 + $0x20] sm:$0xff] %v1237
    %1254 = vst [vmem:[#allocation16 + $0x28] sm:$0xff] %v1238
    %1255 = vst [vmem:[#allocation16 + $0x30] sm:$0xff] %v1239
    %1256 = vst [vmem:[#allocation16 + $0x38] sm:$0xff] %v1240
    %1257 = vst [vmem:[#allocation16 + $0x40] sm:$0xff] %v1241
    %1258 = vst [vmem:[#allocation16 + $0x48] sm:$0xff] %v1242
    %1259 = vst [vmem:[#allocation16 + $0x50] sm:$0xff] %v1243
    %1260 = vst [vmem:[#allocation16 + $0x58] sm:$0xff] %v1244
    %1261 = vst [vmem:[#allocation16 + $0x60] sm:$0xff] %v1245
    %1262 = vst [vmem:[#allocation16 + $0x68] sm:$0xff] %v1246
    %1263 = vst [vmem:[#allocation16 + $0x70] sm:$0xff] %v1247
    %1264 = vst [vmem:[#allocation16 + $0x78] sm:$0xff] %v1248
    // Predicated region
    $region78: #{tpu_custom_call.1} parent=1 // pred_check
      _
    $region79: #{tpu_custom_call.1} parent=1 // pred_check_branch
      %1266 = sbr.rel (0) target = $region81
    $region80: #{tpu_custom_call.1} parent=1 // pred_region
      %1268 = vsyncadd [#allocation4], 0
      %s1269 = sshll.u32 [#allocation16], 4
      %s1270 = int_to_ptr.vmem [resolvable:$true] %s1269
      %s1271 = sshll.u32 %s11, 4
      %s1272 = int_to_ptr.hbm [resolvable:$true] %s1271
      %1277 = dma.vmem_to_hbm [thread:$0]  %s1270, 2048, %s1272, [#allocation4], 128, 128, 8
    $region81: #{tpu_custom_call.1} parent=1 // pred_fallthru
      _
    // Predicated region
    $region82: #{tpu_custom_call.1} parent=1 // pred_check
      _
    $region83: #{tpu_custom_call.1} parent=1 // pred_check_branch
      %1279 = sbr.rel (0) target = $region85
    $region84: #{tpu_custom_call.1} parent=1 // pred_region
      %1281 = dma.done [#allocation4], 2048
    $region85: #{tpu_custom_call.1} parent=1 // pred_fallthru
      _
    %1282 = vsyncpa [#allocation3], 1
    %1283 = vsyncpa [#allocation6], 1
    %1284 = vsyncpa [#allocation9], 1
    %1285 = vsyncpa [#allocation12], 1
    %1286 = vsyncpa [#allocation15], 1
    %1287 = vsyncpa [#allocation4], 1

</llo_original>
